<compile_context>
chip_gen: v5e
topology: v5e:2x2
jax: 0.10.0
libtpu: 0.0.40
codegen_flags: <defaults>
</compile_context>

<pallas_src>
import jax
import jax.numpy as jnp
from jax.experimental import pallas as pl
from jax.experimental.pallas import tpu as pltpu


LANE = 128          # lane-dense width for the task/logit axis
NEG_INF = -1e30     # pad-column bias so padded logits vanish from the softmax


def multi_cls_kernel(emb_ref, w_ref, b_ref, out_ref):
    # One batch tile per grid step.  All task heads are fused into a single
    # bf16 MXU matmul with f32 accumulation; the joint normalization
    # (log-softmax across the concatenated task logits) runs in f32.
    emb = emb_ref[...]                                    # [TB, H]  bf16
    w = w_ref[...]                                        # [H, Tp]  bf16 (resident)
    b = b_ref[...]                                        # [1, Tp]  f32  (resident)
    logits = jnp.dot(emb, w, preferred_element_type=jnp.float32) + b  # [TB, Tp] f32

    # Joint log-softmax in f32.  Pad columns carry bias=-1e30, so their exp
    # underflows to 0 and they never win the max.
    m = jnp.max(logits, axis=-1, keepdims=True)
    z = logits - m
    lse = jnp.log(jnp.sum(jnp.exp(z), axis=-1, keepdims=True))
    out_ref[...] = (z - lse).astype(out_ref.dtype)


def _round_up(x, m):
    return (x + m - 1) // m * m


def multi_classification_forward(embedding, w, b, *, block_b=None):
    """embedding: [B, H] f32, w: [H, T] f32, b: [T] f32 -> [B, T] f32 joint log-probs."""
    B, H = embedding.shape
    T = w.shape[1]

    # ---- lane-dense task axis: pad T up to a multiple of 128 ----
    Tp = _round_up(max(T, 1), LANE)
    w_p = jnp.zeros((H, Tp), jnp.float32).at[:, :T].set(w.astype(jnp.float32))
    b_p = jnp.full((1, Tp), NEG_INF, jnp.float32).at[0, :T].set(b.astype(jnp.float32))

    # ---- batch tile: largest multiple of 8 under a conservative VMEM budget
    # (fits v7x 64 MiB physical / 32 MiB scoped; generous on v5e/v6e).
    if block_b is None:
        budget = 24 * 1024 * 1024
        resident = H * Tp * 2 + Tp * 4                 # bf16 W + f32 bias
        per_row = 2 * (H * 2) + 2 * (Tp * 4)           # dbl-buffered emb + out
        block_b = max(8, min(1024, (budget - resident) // max(per_row, 1)))
        block_b = max(8, (block_b // 8) * 8)
    TB = min(block_b, _round_up(B, 8))
    Bp = _round_up(B, TB)

    emb_p = embedding
    if Bp != B:
        emb_p = jnp.zeros((Bp, H), embedding.dtype).at[:B].set(embedding)

    # bf16 inputs to the MXU (f32 accumulation in-kernel) -> half the HBM traffic.
    emb_bf16 = emb_p.astype(jnp.bfloat16)
    w_bf16 = w_p.astype(jnp.bfloat16)

    cost = pl.CostEstimate(
        flops=2 * Bp * H * Tp,
        transcendentals=Bp * Tp,
        bytes_accessed=2 * Bp * H + 2 * H * Tp + 4 * Tp + 4 * Bp * Tp,
    )

    out_p = pl.pallas_call(
        multi_cls_kernel,
        out_shape=jax.ShapeDtypeStruct((Bp, Tp), jnp.float32),
        grid_spec=pltpu.PrefetchScalarGridSpec(
            num_scalar_prefetch=0,
            grid=(Bp // TB,),
            in_specs=[
                pl.BlockSpec((TB, H), lambda i: (i, 0)),   # streamed batch tile
                pl.BlockSpec((H, Tp), lambda i: (0, 0)),   # resident weights
                pl.BlockSpec((1, Tp), lambda i: (0, 0)),   # resident bias
            ],
            out_specs=pl.BlockSpec((TB, Tp), lambda i: (i, 0)),
        ),
        compiler_params=pltpu.CompilerParams(
            dimension_semantics=("parallel",),             # megacore on v7x
            vmem_limit_bytes=32 * 1024 * 1024,
        ),
        cost_estimate=cost,
    )(emb_bf16, w_bf16, b_p)

    return out_p[:B, :T]


def reference_forward(embedding, w, b):
    # Reference with the same bf16 input quantization (f32 accumulation + f32
    # log-softmax) so tolerances stay tight.
    emb_f = embedding.astype(jnp.bfloat16).astype(jnp.float32)
    w_f = w.astype(jnp.bfloat16).astype(jnp.float32)
    logits = emb_f @ w_f + b[None, :]
    return jax.nn.log_softmax(logits, axis=-1)


if __name__ == "__main__":
    key = jax.random.PRNGKey(0)
    # batch, embedding dim, number of task heads.  B is deliberately not a
    # multiple of the batch tile to exercise padding + multi-step grid.
    B, H, T = 300, 256, 5

    k_emb, k_w, k_b = jax.random.split(key, 3)
    embedding = jax.random.normal(k_emb, (B, H), dtype=jnp.float32)
    # Deterministic per-task linear head parameters (stacked).
    w = jax.random.normal(k_w, (H, T), dtype=jnp.float32) * 0.1
    b = jax.random.normal(k_b, (T,), dtype=jnp.float32) * 0.1

    out = multi_classification_forward(embedding, w, b, block_b=128)
    out = jax.block_until_ready(out)

    ref = reference_forward(embedding, w, b)
    assert out.shape == (B, T)
    assert jnp.allclose(out, ref, atol=1e-3, rtol=1e-3), "mismatch vs reference"
    # Sanity: rows are valid log-probability distributions.
    assert jnp.allclose(jnp.sum(jnp.exp(out), axis=-1), 1.0, atol=1e-4)

    print("KERNEL_OK")
</pallas_src>

<mosaic_0001>
module attributes {stable_mosaic.version = 11 : i64} {
  func.func @multi_cls_kernel(%arg0: i32, %arg1: memref<128x256xbf16, #tpu.memory_space<vmem>>, %arg2: memref<256x128xbf16, #tpu.memory_space<vmem>>, %arg3: memref<1x128xf32, #tpu.memory_space<vmem>>, %arg4: memref<128x128xf32, #tpu.memory_space<vmem>>) attributes {dimension_semantics = [#tpu.dimension_semantics<parallel>], iteration_bounds = array<i64: 3>, scalar_prefetch = 0 : i64, scratch_operands = 0 : i64, tpu.core_type = #tpu.core_type<tc>, window_params = [{transform_indices = @transform_0, window_bounds = array<i64: 128, 256>}, {pipeline_mode = #tpu.pipeline_mode<synchronous>, transform_indices = @transform_1, window_bounds = array<i64: 256, 128>}, {pipeline_mode = #tpu.pipeline_mode<synchronous>, transform_indices = @transform_2, window_bounds = array<i64: 1, 128>}, {transform_indices = @transform_3, window_bounds = array<i64: 128, 128>}]} {
    %c0 = arith.constant 0 : index
    %c0_0 = arith.constant 0 : index
    %0 = vector.load %arg1[%c0, %c0_0] : memref<128x256xbf16, #tpu.memory_space<vmem>>, vector<128x256xbf16>
    %c0_1 = arith.constant 0 : index
    %c0_2 = arith.constant 0 : index
    %1 = vector.load %arg2[%c0_1, %c0_2] : memref<256x128xbf16, #tpu.memory_space<vmem>>, vector<256x128xbf16>
    %c0_3 = arith.constant 0 : index
    %c0_4 = arith.constant 0 : index
    %2 = vector.load %arg3[%c0_3, %c0_4] : memref<1x128xf32, #tpu.memory_space<vmem>>, vector<1x128xf32>
    %cst = arith.constant dense<0.000000e+00> : vector<128x128xf32>
    %3 = tpu.matmul %0, %1, %cst {dimension_numbers = #tpu.dot_dimension_numbers<[1], [0], [0], [1], [0, 0, 1, 1], [], []>} : vector<128x256xbf16>, vector<256x128xbf16>, vector<128x128xf32> -> vector<128x128xf32>
    %4 = vector.broadcast %2 : vector<1x128xf32> to vector<128x128xf32>
    %5 = arith.addf %3, %4 : vector<128x128xf32>
    %cst_5 = arith.constant dense<0xFF800000> : vector<128xf32>
    %6 = vector.multi_reduction <maximumf>, %5, %cst_5 [1] : vector<128x128xf32> to vector<128xf32>
    %7 = vector.shape_cast %6 : vector<128xf32> to vector<128x1xf32>
    %8 = vector.broadcast %7 : vector<128x1xf32> to vector<128x128xf32>
    %9 = arith.subf %5, %8 : vector<128x128xf32>
    %10 = math.exp %9 : vector<128x128xf32>
    %cst_6 = arith.constant dense<0.000000e+00> : vector<128xf32>
    %11 = vector.multi_reduction <add>, %10, %cst_6 [1] : vector<128x128xf32> to vector<128xf32>
    %12 = vector.shape_cast %11 : vector<128xf32> to vector<128x1xf32>
    %13 = math.log %12 : vector<128x1xf32>
    %14 = vector.broadcast %13 : vector<128x1xf32> to vector<128x128xf32>
    %15 = arith.subf %9, %14 : vector<128x128xf32>
    %c0_7 = arith.constant 0 : index
    %c0_8 = arith.constant 0 : index
    %16 = vector.load %arg4[%c0_7, %c0_8] : memref<128x128xf32, #tpu.memory_space<vmem>>, vector<128x128xf32>
    tpu.vector_store %arg4[%c0_7, %c0_8], %15 {strides = array<i32>} : memref<128x128xf32, #tpu.memory_space<vmem>>, vector<128x128xf32>,
    return
  }
  func.func @transform_0(%arg0: i32) -> (i32, i32) {
    %c0_i32 = arith.constant 0 : i32
    %c0_i32_0 = arith.constant 0 : i32
    return %arg0, %c0_i32 : i32, i32
  }
  func.func @transform_1(%arg0: i32) -> (i32, i32) {
    %c0_i32 = arith.constant 0 : i32
    %c0_i32_0 = arith.constant 0 : i32
    %c0_i32_1 = arith.constant 0 : i32
    return %c0_i32, %c0_i32_0 : i32, i32
  }
  func.func @transform_2(%arg0: i32) -> (i32, i32) {
    %c0_i32 = arith.constant 0 : i32
    %c0_i32_0 = arith.constant 0 : i32
    %c0_i32_1 = arith.constant 0 : i32
    return %c0_i32, %c0_i32_0 : i32, i32
  }
  func.func @transform_3(%arg0: i32) -> (i32, i32) {
    %c0_i32 = arith.constant 0 : i32
    %c0_i32_0 = arith.constant 0 : i32
    return %arg0, %c0_i32 : i32, i32
  }
}

</mosaic_0001>

<llo_original>
// kernel: tpu_custom_call.1
$region0: #{tpu_custom_call.1}
  #allocation0 [shape = 'u32[]', space=smem, size = 0x4, offset = 0x4, fixed_abs, tag = 'smem constant byte address 0x4 - core index']
  #allocation1 [shape = 'u32[72,128]{1,0:T(1,128)}', space=vmem, size = 0x9000, scoped, tag = 'internal scratch']
  %s0 = inlined_call_operand.hbm [shape: bf16[384,256], index: 0, kind: input, shape index: {}]
  %s1 = inlined_call_operand.hbm [shape: bf16[256,128], index: 1, kind: input, shape index: {}]
  %s2 = inlined_call_operand.vmem [shape: f32[1,128], index: 2, kind: input, shape index: {}]
  %s3 = inlined_call_operand.hbm [shape: f32[384,128], index: 3, kind: output, shape index: {}]
  %s4 = sld [smem:[#allocation0]]
  $region53: #{tpu_custom_call.1} parent=0
    _
  %s6 = ssub.s32 1, %s4
  %s7 = scalar_select 0, %s6, %s4
  $region1: #{tpu_custom_call.1} parent=0
    #allocation2 [shape = 'u8[131072]{0}', space=vmem, size = 0x20000, scoped, tag = 'input window, operand 0']
    #allocation3 [shape = 's32[2]{0}', space=sflag, size = 0x8, scoped, tag = 'scoped memory for tpu_custom_call.1']
    #allocation4 [shape = 's32[2]{0}', space=sflag, size = 0x8, scoped, tag = 'scoped memory for tpu_custom_call.1']
    #allocation5 [shape = 'u8[65536]{0}', space=vmem, size = 0x10000, scoped, tag = 'input window, operand 1, single buffered']
    #allocation6 [shape = 's32[1]{0}', space=sflag, size = 0x4, scoped, tag = 'scoped memory for tpu_custom_call.1']
    #allocation7 [shape = 'u8[131072]{0}', space=vmem, size = 0x20000, scoped, tag = 'output window, operand 0']
    %8 = vsyncpa [#allocation3], 0
    %s9 = scalar_lea.sflag [#allocation3], 1
    %10 = vsyncpa %s9, 0
    %11 = vsyncpa [#allocation6], 0
    %12 = vsyncpa [#allocation4], 0
    %s13 = scalar_lea.sflag [#allocation4], 1
    %14 = vsyncpa %s13, 0
    loop: start=0, step=1, limit=5
    $region2: #{tpu_custom_call.1} parent=1 // loop_pre_header
      _
    $region3: #{tpu_custom_call.1} parent=1 // loop_header
      %s16 = sphi 0, %s20
      %p17 = scmp.ge.s32.totalorder %s16, 5
      %s26 = sphi 0, %s28
      %s29 = sphi 0, %s26
      %s30 = sphi 0, %s29
      %s46 = sphi 0, %s30
      %s50 = sphi 0, %s50
      %s52 = sphi 0, %s50
      %s53 = sphi 0, %s52
      %s67 = sphi 0, %s53
      %s71 = sphi 0, %s71
      %s73 = sphi 0, %s71
      %s74 = sphi 0, %s73
      %s88 = sphi 0, %s74
      %s94 = sphi 0, %s96
      %s97 = sphi 0, %s94
      %s98 = sphi 0, %s97
      %s114 = sphi 0, %s98
    $region4: #{tpu_custom_call.1} parent=1 // loop_header_branch
      %19 = sbr.rel (%p17) target = $region8
    $region5: #{tpu_custom_call.1} parent=1 // loop_body
      %s21 = ssub.s32 %s16, 1
      %s22 = ssub.s32 %s16, 2
      %s23 = sadd.s32 %s16, 1
      %s24 = ssub.s32 %s16, %s23
      %p25 = scmp.eq.s32.totalorder %s24, 0
      %s27 = sadd.s32 %s26, 1
      %s28 = scalar_select %p25, %s26, %s27
      %p31 = pneg %p25
      %p32 = scmp.eq.s32.totalorder %s16, 2
      %p33 = por %p31, %p32
      %p34 = scmp.ne.s32.totalorder %s26, %s29
      %p35 = scmp.eq.s32.totalorder %s16, 0
      %p36 = por %p34, %p35
      %p37 = scmp.ne.s32.totalorder %s26, %s29
      %p38 = scmp.eq.s32.totalorder %s21, 2
      %p39 = por %p37, %p38
      %p40 = scmp.ne.s32.totalorder %s29, %s30
      %p41 = scmp.eq.s32.totalorder %s21, 0
      %p42 = por %p40, %p41
      %p43 = scmp.ne.s32.totalorder %s29, %s30
      %p44 = scmp.eq.s32.totalorder %s22, 2
      %p45 = por %p43, %p44
      %p47 = scmp.ne.s32.totalorder %s30, %s46
      %p48 = scmp.eq.s32.totalorder %s22, 0
      %p49 = por %p47, %p48
      %s51 = sadd.s32 %s50, 1
      %p54 = scmp.eq.s32.totalorder %s16, 2
      %p55 = scmp.ne.s32.totalorder %s50, %s52
      %p56 = scmp.eq.s32.totalorder %s16, 0
      %p57 = por %p55, %p56
      %p58 = scmp.ne.s32.totalorder %s50, %s52
      %p59 = scmp.eq.s32.totalorder %s21, 2
      %p60 = por %p58, %p59
      %p61 = scmp.ne.s32.totalorder %s52, %s53
      %p62 = scmp.eq.s32.totalorder %s21, 0
      %p63 = por %p61, %p62
      %p64 = scmp.ne.s32.totalorder %s52, %s53
      %p65 = scmp.eq.s32.totalorder %s22, 2
      %p66 = por %p64, %p65
      %p68 = scmp.ne.s32.totalorder %s53, %s67
      %p69 = scmp.eq.s32.totalorder %s22, 0
      %p70 = por %p68, %p69
      %s72 = sadd.s32 %s71, 1
      %p75 = scmp.eq.s32.totalorder %s16, 2
      %p76 = scmp.ne.s32.totalorder %s71, %s73
      %p77 = scmp.eq.s32.totalorder %s16, 0
      %p78 = por %p76, %p77
      %p79 = scmp.ne.s32.totalorder %s71, %s73
      %p80 = scmp.eq.s32.totalorder %s21, 2
      %p81 = por %p79, %p80
      %p82 = scmp.ne.s32.totalorder %s73, %s74
      %p83 = scmp.eq.s32.totalorder %s21, 0
      %p84 = por %p82, %p83
      %p85 = scmp.ne.s32.totalorder %s73, %s74
      %p86 = scmp.eq.s32.totalorder %s22, 2
      %p87 = por %p85, %p86
      %p89 = scmp.ne.s32.totalorder %s74, %s88
      %p90 = scmp.eq.s32.totalorder %s22, 0
      %p91 = por %p89, %p90
      %s92 = ssub.s32 %s16, %s23
      %p93 = scmp.eq.s32.totalorder %s92, 0
      %s95 = sadd.s32 %s94, 1
      %s96 = scalar_select %p93, %s94, %s95
      %p99 = pneg %p93
      %p100 = scmp.eq.s32.totalorder %s16, 2
      %p101 = por %p99, %p100
      %p102 = scmp.ne.s32.totalorder %s94, %s97
      %p103 = scmp.eq.s32.totalorder %s16, 0
      %p104 = por %p102, %p103
      %p105 = scmp.ne.s32.totalorder %s94, %s97
      %p106 = scmp.eq.s32.totalorder %s21, 2
      %p107 = por %p105, %p106
      %p108 = scmp.ne.s32.totalorder %s97, %s98
      %p109 = scmp.eq.s32.totalorder %s21, 0
      %p110 = por %p108, %p109
      %p111 = scmp.ne.s32.totalorder %s97, %s98
      %p112 = scmp.eq.s32.totalorder %s22, 2
      %p113 = por %p111, %p112
      %p115 = scmp.ne.s32.totalorder %s98, %s114
      %p116 = scmp.eq.s32.totalorder %s22, 0
      %p117 = por %p115, %p116
      %p118 = scmp.le.s32.totalorder 1, %s16
      %p119 = scmp.lt.s32.totalorder %s16, 4
      %p120 = pnand %p118, %p119
      %p121 = pneg %p120
      // Predicated region
      $region9: #{tpu_custom_call.1} parent=5 // pred_check
        _
      $region10: #{tpu_custom_call.1} parent=5 // pred_check_branch
        %123 = sbr.rel (%p120) target = $region12
      $region11: #{tpu_custom_call.1} parent=5 // pred_region
        %s124 = ssub.s32 %s16, 1
        // Predicated region
        $region13: #{tpu_custom_call.1} parent=11 // pred_check
          %p125 = pneg %p63
        $region14: #{tpu_custom_call.1} parent=11 // pred_check_branch
          %127 = sbr.rel (%p125) target = $region16
        $region15: #{tpu_custom_call.1} parent=11 // pred_region
          %129 = vsyncadd [#allocation6], 0
          %s130 = sshll.u32 %s1, 4
          %s131 = int_to_ptr.hbm [resolvable:$true] %s130
          %s132 = sshll.u32 [#allocation5], 4
          %s133 = int_to_ptr.vmem [resolvable:$true] %s132
          %138 = dma.hbm_to_vmem [thread:$0]  %s131, 2048, %s133, [#allocation6], 64, 64, 4
        $region16: #{tpu_custom_call.1} parent=11 // pred_fallthru
          _
        // Predicated region
        $region17: #{tpu_custom_call.1} parent=11 // pred_check
          %p139 = pneg %p84
        $region18: #{tpu_custom_call.1} parent=11 // pred_check_branch
          %141 = sbr.rel (%p139) target = $region20
        $region19: #{tpu_custom_call.1} parent=11 // pred_region
          _
        $region20: #{tpu_custom_call.1} parent=11 // pred_fallthru
          _
      $region12: #{tpu_custom_call.1} parent=5 // pred_fallthru
        _
      %p142 = scmp.lt.s32.totalorder %s16, 3
      // Predicated region
      $region21: #{tpu_custom_call.1} parent=5 // pred_check
        %p143 = pneg %p142
      $region22: #{tpu_custom_call.1} parent=5 // pred_check_branch
        %145 = sbr.rel (%p143) target = $region24
      $region23: #{tpu_custom_call.1} parent=5 // pred_region
        // Predicated region
        $region25: #{tpu_custom_call.1} parent=23 // pred_check
          %p146 = pneg %p36
        $region26: #{tpu_custom_call.1} parent=23 // pred_check_branch
          %148 = sbr.rel (%p146) target = $region28
        $region27: #{tpu_custom_call.1} parent=23 // pred_region
          %s149 = sand.u32 %s26, 1
          %s150 = scalar_lea.sflag [#allocation3], %s149
          %s151 = sand.u32 %s26, 1
          %s152 = smul.addr %s151, 128
          %s153 = scalar_lea.vmem [#allocation2], %s152
          %s154 = smul.u32 16, %s16
          %156 = vsyncadd %s150, 0
          %s157 = smul.addr %s154, 2
          %s158 = smul.addr %s157, 4
          %s159 = scalar_lea.hbm %s0, %s158
          %s160 = sshll.u32 %s159, 4
          %s161 = int_to_ptr.hbm [resolvable:$true] %s160
          %s162 = sshll.u32 %s153, 4
          %s163 = int_to_ptr.vmem [resolvable:$true] %s162
          %168 = dma.hbm_to_vmem [thread:$0]  %s161, 2048, %s163, %s150, 128, 128, 8
        $region28: #{tpu_custom_call.1} parent=23 // pred_fallthru
          _
      $region24: #{tpu_custom_call.1} parent=5 // pred_fallthru
        _
      %p169 = scmp.le.s32.totalorder 1, %s16
      %p170 = scmp.lt.s32.totalorder %s16, 4
      %p171 = pnand %p169, %p170
      %p172 = pneg %p171
      // Predicated region
      $region29: #{tpu_custom_call.1} parent=5 // pred_check
        _
      $region30: #{tpu_custom_call.1} parent=5 // pred_check_branch
        %174 = sbr.rel (%p171) target = $region32
      $region31: #{tpu_custom_call.1} parent=5 // pred_region
        %s175 = ssub.s32 %s16, 1
        %s176 = sand.u32 %s29, 1
        %s177 = scalar_lea.sflag [#allocation3], %s176
        %s178 = sand.u32 %s29, 1
        %s179 = smul.addr %s178, 128
        %s180 = scalar_lea.vmem [#allocation2], %s179
        // Predicated region
        $region33: #{tpu_custom_call.1} parent=31 // pred_check
          %p181 = pneg %p42
        $region34: #{tpu_custom_call.1} parent=31 // pred_check_branch
          %183 = sbr.rel (%p181) target = $region36
        $region35: #{tpu_custom_call.1} parent=31 // pred_region
          %185 = dma.done %s177, 2048
        $region36: #{tpu_custom_call.1} parent=31 // pred_fallthru
          _
        // Predicated region
        $region37: #{tpu_custom_call.1} parent=31 // pred_check
          %p186 = pneg %p63
        $region38: #{tpu_custom_call.1} parent=31 // pred_check_branch
          %188 = sbr.rel (%p186) target = $region40
        $region39: #{tpu_custom_call.1} parent=31 // pred_region
          %190 = dma.done [#allocation6], 2048
        $region40: #{tpu_custom_call.1} parent=31 // pred_fallthru
          _
        %s191 = sand.u32 %s29, 1
        %s192 = scalar_lea.sflag [#allocation3], %s191
        %s193 = sand.u32 %s29, 1
        %s194 = smul.addr %s193, 128
        %s195 = scalar_lea.vmem [#allocation2], %s194
        %p196 = pneg %p42
        %p197 = pneg %p39
        %p198 = pneg %p63
        %p199 = pneg %p60
        %p200 = pneg %p84
        %p201 = pneg %p81
        %p202 = pneg %p110
        %p203 = pneg %p107
        %s204 = sand.u32 %s97, 1
        %s205 = scalar_lea.sflag [#allocation4], %s204
        %s206 = sand.u32 %s97, 1
        %s207 = smul.addr %s206, 128
        %s208 = scalar_lea.vmem [#allocation7], %s207
        %s209 = smul.u32 16, %s21
        %s210 = smul.u32 16, %s21
        %v211 = vld [vmem:[%s180] sm:$0xff]
        %v212 = vld [vmem:[%s180 + $0x8] sm:$0xff]
        %v213 = vld [vmem:[%s180 + $0x10] sm:$0xff]
        %v214 = vld [vmem:[%s180 + $0x18] sm:$0xff]
        %v215 = vld [vmem:[%s180 + $0x20] sm:$0xff]
        %v216 = vld [vmem:[%s180 + $0x28] sm:$0xff]
        %v217 = vld [vmem:[%s180 + $0x30] sm:$0xff]
        %v218 = vld [vmem:[%s180 + $0x38] sm:$0xff]
        %v219 = vld [vmem:[%s180 + $0x40] sm:$0xff]
        %v220 = vld [vmem:[%s180 + $0x48] sm:$0xff]
        %v221 = vld [vmem:[%s180 + $0x50] sm:$0xff]
        %v222 = vld [vmem:[%s180 + $0x58] sm:$0xff]
        %v223 = vld [vmem:[%s180 + $0x60] sm:$0xff]
        %v224 = vld [vmem:[%s180 + $0x68] sm:$0xff]
        %v225 = vld [vmem:[%s180 + $0x70] sm:$0xff]
        %v226 = vld [vmem:[%s180 + $0x78] sm:$0xff]
        %v227 = vld [vmem:[#allocation5] sm:$0xf]
        %v228 = vld [vmem:[#allocation5 + $0x4] sm:$0xf]
        %v229 = vld [vmem:[#allocation5 + $0x8] sm:$0xf]
        %v230 = vld [vmem:[#allocation5 + $0xc] sm:$0xf]
        %v231 = vld [vmem:[#allocation5 + $0x10] sm:$0xf]
        %v232 = vld [vmem:[#allocation5 + $0x14] sm:$0xf]
        %v233 = vld [vmem:[#allocation5 + $0x18] sm:$0xf]
        %v234 = vld [vmem:[#allocation5 + $0x1c] sm:$0xf]
        %v235 = vld [vmem:[#allocation5 + $0x20] sm:$0xf]
        %v236 = vld [vmem:[#allocation5 + $0x24] sm:$0xf]
        %v237 = vld [vmem:[#allocation5 + $0x28] sm:$0xf]
        %v238 = vld [vmem:[#allocation5 + $0x2c] sm:$0xf]
        %v239 = vld [vmem:[#allocation5 + $0x30] sm:$0xf]
        %v240 = vld [vmem:[#allocation5 + $0x34] sm:$0xf]
        %v241 = vld [vmem:[#allocation5 + $0x38] sm:$0xf]
        %v242 = vld [vmem:[#allocation5 + $0x3c] sm:$0xf]
        %v243 = vld [vmem:[#allocation5 + $0x40] sm:$0xf]
        %v244 = vld [vmem:[#allocation5 + $0x44] sm:$0xf]
        %v245 = vld [vmem:[#allocation5 + $0x48] sm:$0xf]
        %v246 = vld [vmem:[#allocation5 + $0x4c] sm:$0xf]
        %v247 = vld [vmem:[#allocation5 + $0x50] sm:$0xf]
        %v248 = vld [vmem:[#allocation5 + $0x54] sm:$0xf]
        %v249 = vld [vmem:[#allocation5 + $0x58] sm:$0xf]
        %v250 = vld [vmem:[#allocation5 + $0x5c] sm:$0xf]
        %v251 = vld [vmem:[#allocation5 + $0x60] sm:$0xf]
        %v252 = vld [vmem:[#allocation5 + $0x64] sm:$0xf]
        %v253 = vld [vmem:[#allocation5 + $0x68] sm:$0xf]
        %v254 = vld [vmem:[#allocation5 + $0x6c] sm:$0xf]
        %v255 = vld [vmem:[#allocation5 + $0x70] sm:$0xf]
        %v256 = vld [vmem:[#allocation5 + $0x74] sm:$0xf]
        %v257 = vld [vmem:[#allocation5 + $0x78] sm:$0xf]
        %v258 = vld [vmem:[#allocation5 + $0x7c] sm:$0xf]
        %v259 = vld [vmem:[%s2] sm:$0x1]
        %v261 = vperm.slane %v259, 0
        %v279 = vunpack.c.l.b16 %v211
        %v280 = vunpack.c.h.b16 %v211
        %v281 = vunpack.c.l.b16 %v212
        %v282 = vunpack.c.h.b16 %v212
        %v283 = vunpack.c.l.b16 %v213
        %v284 = vunpack.c.h.b16 %v213
        %v285 = vunpack.c.l.b16 %v214
        %v286 = vunpack.c.h.b16 %v214
        %v287 = vunpack.c.l.b16 %v215
        %v288 = vunpack.c.h.b16 %v215
        %v289 = vunpack.c.l.b16 %v216
        %v290 = vunpack.c.h.b16 %v216
        %v291 = vunpack.c.l.b16 %v217
        %v292 = vunpack.c.h.b16 %v217
        %v293 = vunpack.c.l.b16 %v218
        %v294 = vunpack.c.h.b16 %v218
        %v295 = vunpack.c.l.b16 %v219
        %v296 = vunpack.c.h.b16 %v219
        %v297 = vunpack.c.l.b16 %v220
        %v298 = vunpack.c.h.b16 %v220
        %v299 = vunpack.c.l.b16 %v221
        %v300 = vunpack.c.h.b16 %v221
        %v301 = vunpack.c.l.b16 %v222
        %v302 = vunpack.c.h.b16 %v222
        %v303 = vunpack.c.l.b16 %v223
        %v304 = vunpack.c.h.b16 %v223
        %v305 = vunpack.c.l.b16 %v224
        %v306 = vunpack.c.h.b16 %v224
        %v307 = vunpack.c.l.b16 %v225
        %v308 = vunpack.c.h.b16 %v225
        %v309 = vunpack.c.l.b16 %v226
        %v310 = vunpack.c.h.b16 %v226
        %v311 = vpack.c.b16 %v281, %v279
        %v312 = vpack.c.b16 %v282, %v280
        %v313 = vpack.c.b16 %v285, %v283
        %v314 = vpack.c.b16 %v286, %v284
        %v315 = vpack.c.b16 %v289, %v287
        %v316 = vpack.c.b16 %v290, %v288
        %v317 = vpack.c.b16 %v293, %v291
        %v318 = vpack.c.b16 %v294, %v292
        %v319 = vpack.c.b16 %v297, %v295
        %v320 = vpack.c.b16 %v298, %v296
        %v321 = vpack.c.b16 %v301, %v299
        %v322 = vpack.c.b16 %v302, %v300
        %v323 = vpack.c.b16 %v305, %v303
        %v324 = vpack.c.b16 %v306, %v304
        %v325 = vpack.c.b16 %v309, %v307
        %v326 = vpack.c.b16 %v310, %v308
        %v375 = vunpack.c.l.b16 %v227
        %v376 = vunpack.c.l.b16 %v228
        %v377 = vunpack.c.l.b16 %v229
        %v378 = vunpack.c.l.b16 %v230
        %v379 = vunpack.c.l.b16 %v231
        %v380 = vunpack.c.l.b16 %v232
        %v381 = vunpack.c.l.b16 %v233
        %v382 = vunpack.c.l.b16 %v234
        %v383 = vunpack.c.l.b16 %v235
        %v384 = vunpack.c.l.b16 %v236
        %v385 = vunpack.c.l.b16 %v237
        %v386 = vunpack.c.l.b16 %v238
        %v387 = vunpack.c.l.b16 %v239
        %v388 = vunpack.c.l.b16 %v240
        %v389 = vunpack.c.l.b16 %v241
        %v390 = vunpack.c.l.b16 %v242
        %v391 = vunpack.c.l.b16 %v243
        %v392 = vunpack.c.l.b16 %v244
        %v393 = vunpack.c.l.b16 %v245
        %v394 = vunpack.c.l.b16 %v246
        %v395 = vunpack.c.l.b16 %v247
        %v396 = vunpack.c.l.b16 %v248
        %v397 = vunpack.c.l.b16 %v249
        %v398 = vunpack.c.l.b16 %v250
        %v399 = vunpack.c.l.b16 %v251
        %v400 = vunpack.c.l.b16 %v252
        %v401 = vunpack.c.l.b16 %v253
        %v402 = vunpack.c.l.b16 %v254
        %v403 = vunpack.c.l.b16 %v255
        %v404 = vunpack.c.l.b16 %v256
        %v405 = vunpack.c.l.b16 %v257
        %v406 = vunpack.c.l.b16 %v258
        %v407 = vpack.c.b16 %v376, %v375
        %v408 = vpack.c.b16 %v378, %v377
        %v409 = vpack.c.b16 %v380, %v379
        %v410 = vpack.c.b16 %v382, %v381
        %v411 = vpack.c.b16 %v384, %v383
        %v412 = vpack.c.b16 %v386, %v385
        %v413 = vpack.c.b16 %v388, %v387
        %v414 = vpack.c.b16 %v390, %v389
        %v415 = vpack.c.b16 %v392, %v391
        %v416 = vpack.c.b16 %v394, %v393
        %v417 = vpack.c.b16 %v396, %v395
        %v418 = vpack.c.b16 %v398, %v397
        %v419 = vpack.c.b16 %v400, %v399
        %v420 = vpack.c.b16 %v402, %v401
        %v421 = vpack.c.b16 %v404, %v403
        %v422 = vpack.c.b16 %v406, %v405
        %439 = vmatpush.bf16.msra.mxu0 %v414
        %440 = vmatpush.bf16.msra.mxu0 %v413
        %441 = vmatpush.bf16.msra.mxu0 %v412
        %442 = vmatpush.bf16.msra.mxu0 %v411
        %443 = vmatpush.bf16.msra.mxu0 %v410
        %444 = vmatpush.bf16.msra.mxu0 %v409
        %445 = vmatpush.bf16.msra.mxu0 %v408
        %446 = vmatpush.bf16.msra.mxu0 %v407
        %447 = vmatmul.bf16.gmra.mxu0 %v311
        %v448 = vpop.f32.mrf.mxu0
        %v449 = vadd.f32 %v261, %v448
        %v450 = vpop.f32.mrf.mxu0
        %v451 = vadd.f32 %v261, %v450
        %452 = vmatmul.bf16.gmra.mxu0 %v313
        %v453 = vpop.f32.mrf.mxu0
        %v454 = vadd.f32 %v261, %v453
        %v455 = vpop.f32.mrf.mxu0
        %v456 = vadd.f32 %v261, %v455
        %457 = vmatmul.bf16.gmra.mxu0 %v315
        %v458 = vpop.f32.mrf.mxu0
        %v459 = vadd.f32 %v261, %v458
        %v460 = vpop.f32.mrf.mxu0
        %v461 = vadd.f32 %v261, %v460
        %462 = vmatmul.bf16.gmra.mxu0 %v317
        %v463 = vpop.f32.mrf.mxu0
        %v464 = vadd.f32 %v261, %v463
        %v465 = vpop.f32.mrf.mxu0
        %v466 = vadd.f32 %v261, %v465
        %467 = vmatmul.bf16.gmra.mxu0 %v319
        %v468 = vpop.f32.mrf.mxu0
        %v469 = vadd.f32 %v261, %v468
        %v470 = vpop.f32.mrf.mxu0
        %v471 = vadd.f32 %v261, %v470
        %472 = vmatmul.bf16.gmra.mxu0 %v321
        %v473 = vpop.f32.mrf.mxu0
        %v474 = vadd.f32 %v261, %v473
        %v475 = vpop.f32.mrf.mxu0
        %v476 = vadd.f32 %v261, %v475
        %477 = vmatmul.bf16.gmra.mxu0 %v323
        %v478 = vpop.f32.mrf.mxu0
        %v479 = vadd.f32 %v261, %v478
        %v480 = vpop.f32.mrf.mxu0
        %v481 = vadd.f32 %v261, %v480
        %482 = vmatmul.bf16.gmra.mxu0 %v325
        %v483 = vpop.f32.mrf.mxu0
        %v484 = vadd.f32 %v261, %v483
        %v485 = vpop.f32.mrf.mxu0
        %v486 = vadd.f32 %v261, %v485
        %487 = vdwg.mxu0
        %488 = vmatpush.bf16.msra.mxu0 %v422
        %489 = vmatpush.bf16.msra.mxu0 %v421
        %490 = vmatpush.bf16.msra.mxu0 %v420
        %491 = vmatpush.bf16.msra.mxu0 %v419
        %492 = vmatpush.bf16.msra.mxu0 %v418
        %493 = vmatpush.bf16.msra.mxu0 %v417
        %494 = vmatpush.bf16.msra.mxu0 %v416
        %495 = vmatpush.bf16.msra.mxu0 %v415
        %496 = vmatmul.bf16.gmra.mxu0 %v312
        %v497 = vpop.f32.mrf.mxu0
        %v498 = vadd.f32 %v449, %v497
        %v499 = vpop.f32.mrf.mxu0
        %v500 = vadd.f32 %v451, %v499
        %501 = vmatmul.bf16.gmra.mxu0 %v314
        %v502 = vpop.f32.mrf.mxu0
        %v503 = vadd.f32 %v454, %v502
        %v504 = vpop.f32.mrf.mxu0
        %v505 = vadd.f32 %v456, %v504
        %506 = vmatmul.bf16.gmra.mxu0 %v316
        %v507 = vpop.f32.mrf.mxu0
        %v508 = vadd.f32 %v459, %v507
        %v509 = vpop.f32.mrf.mxu0
        %v510 = vadd.f32 %v461, %v509
        %511 = vmatmul.bf16.gmra.mxu0 %v318
        %v512 = vpop.f32.mrf.mxu0
        %v513 = vadd.f32 %v464, %v512
        %v514 = vpop.f32.mrf.mxu0
        %v515 = vadd.f32 %v466, %v514
        %516 = vmatmul.bf16.gmra.mxu0 %v320
        %v517 = vpop.f32.mrf.mxu0
        %v518 = vadd.f32 %v469, %v517
        %v519 = vpop.f32.mrf.mxu0
        %v520 = vadd.f32 %v471, %v519
        %521 = vmatmul.bf16.gmra.mxu0 %v322
        %v522 = vpop.f32.mrf.mxu0
        %v523 = vadd.f32 %v474, %v522
        %v524 = vpop.f32.mrf.mxu0
        %v525 = vadd.f32 %v476, %v524
        %526 = vmatmul.bf16.gmra.mxu0 %v324
        %v527 = vpop.f32.mrf.mxu0
        %v528 = vadd.f32 %v479, %v527
        %v529 = vpop.f32.mrf.mxu0
        %v530 = vadd.f32 %v481, %v529
        %531 = vmatmul.bf16.gmra.mxu0 %v326
        %v532 = vpop.f32.mrf.mxu0
        %v533 = vadd.f32 %v484, %v532
        %v534 = vpop.f32.mrf.mxu0
        %v535 = vadd.f32 %v486, %v534
        %536 = vdwg.mxu0
        %537 = vmax.xlane.f32.xlu0 %v498
        %v538 = vpop.xlane.xlu0 %537
        %539 = vmax.xlane.f32.xlu0 %v500
        %v540 = vpop.xlane.xlu0 %539
        %541 = vmax.xlane.f32.xlu0 %v503
        %v542 = vpop.xlane.xlu0 %541
        %543 = vmax.xlane.f32.xlu0 %v505
        %v544 = vpop.xlane.xlu0 %543
        %545 = vmax.xlane.f32.xlu0 %v508
        %v546 = vpop.xlane.xlu0 %545
        %547 = vmax.xlane.f32.xlu0 %v510
        %v548 = vpop.xlane.xlu0 %547
        %549 = vmax.xlane.f32.xlu0 %v513
        %v550 = vpop.xlane.xlu0 %549
        %551 = vmax.xlane.f32.xlu0 %v515
        %v552 = vpop.xlane.xlu0 %551
        %553 = vmax.xlane.f32.xlu0 %v518
        %v554 = vpop.xlane.xlu0 %553
        %555 = vmax.xlane.f32.xlu0 %v520
        %v556 = vpop.xlane.xlu0 %555
        %557 = vmax.xlane.f32.xlu0 %v523
        %v558 = vpop.xlane.xlu0 %557
        %559 = vmax.xlane.f32.xlu0 %v525
        %v560 = vpop.xlane.xlu0 %559
        %561 = vmax.xlane.f32.xlu0 %v528
        %v562 = vpop.xlane.xlu0 %561
        %563 = vmax.xlane.f32.xlu0 %v530
        %v564 = vpop.xlane.xlu0 %563
        %565 = vmax.xlane.f32.xlu0 %v533
        %v566 = vpop.xlane.xlu0 %565
        %567 = vmax.xlane.f32.xlu0 %v535
        %v568 = vpop.xlane.xlu0 %567
        %v569 = vsub.f32 %v498, %v538
        %v570 = vsub.f32 %v500, %v540
        %v571 = vsub.f32 %v503, %v542
        %v572 = vsub.f32 %v505, %v544
        %v573 = vsub.f32 %v508, %v546
        %v574 = vsub.f32 %v510, %v548
        %v575 = vsub.f32 %v513, %v550
        %v576 = vsub.f32 %v515, %v552
        %v577 = vsub.f32 %v518, %v554
        %v578 = vsub.f32 %v520, %v556
        %v579 = vsub.f32 %v523, %v558
        %v580 = vsub.f32 %v525, %v560
        %v581 = vsub.f32 %v528, %v562
        %v582 = vsub.f32 %v530, %v564
        %v583 = vsub.f32 %v533, %v566
        %v584 = vsub.f32 %v535, %v568
        %v585 = vmul.f32 %v569, 1.442695
        %v586 = vpow.pop %v585
        %v587 = vmul.f32 %v570, 1.442695
        %v588 = vpow.pop %v587
        %v589 = vmul.f32 %v571, 1.442695
        %v590 = vpow.pop %v589
        %v591 = vmul.f32 %v572, 1.442695
        %v592 = vpow.pop %v591
        %v593 = vmul.f32 %v573, 1.442695
        %v594 = vpow.pop %v593
        %v595 = vmul.f32 %v574, 1.442695
        %v596 = vpow.pop %v595
        %v597 = vmul.f32 %v575, 1.442695
        %v598 = vpow.pop %v597
        %v599 = vmul.f32 %v576, 1.442695
        %v600 = vpow.pop %v599
        %v601 = vmul.f32 %v577, 1.442695
        %v602 = vpow.pop %v601
        %v603 = vmul.f32 %v578, 1.442695
        %v604 = vpow.pop %v603
        %v605 = vmul.f32 %v579, 1.442695
        %v606 = vpow.pop %v605
        %v607 = vmul.f32 %v580, 1.442695
        %v608 = vpow.pop %v607
        %v609 = vmul.f32 %v581, 1.442695
        %v610 = vpow.pop %v609
        %v611 = vmul.f32 %v582, 1.442695
        %v612 = vpow.pop %v611
        %v613 = vmul.f32 %v583, 1.442695
        %v614 = vpow.pop %v613
        %v615 = vmul.f32 %v584, 1.442695
        %v616 = vpow.pop %v615
        %617 = vadd.xlane.f32.xlu0 %v586
        %v618 = vpop.xlane.xlu0 %617
        %619 = vadd.xlane.f32.xlu0 %v588
        %v620 = vpop.xlane.xlu0 %619
        %621 = vadd.xlane.f32.xlu0 %v590
        %v622 = vpop.xlane.xlu0 %621
        %623 = vadd.xlane.f32.xlu0 %v592
        %v624 = vpop.xlane.xlu0 %623
        %625 = vadd.xlane.f32.xlu0 %v594
        %v626 = vpop.xlane.xlu0 %625
        %627 = vadd.xlane.f32.xlu0 %v596
        %v628 = vpop.xlane.xlu0 %627
        %629 = vadd.xlane.f32.xlu0 %v598
        %v630 = vpop.xlane.xlu0 %629
        %631 = vadd.xlane.f32.xlu0 %v600
        %v632 = vpop.xlane.xlu0 %631
        %633 = vadd.xlane.f32.xlu0 %v602
        %v634 = vpop.xlane.xlu0 %633
        %635 = vadd.xlane.f32.xlu0 %v604
        %v636 = vpop.xlane.xlu0 %635
        %637 = vadd.xlane.f32.xlu0 %v606
        %v638 = vpop.xlane.xlu0 %637
        %639 = vadd.xlane.f32.xlu0 %v608
        %v640 = vpop.xlane.xlu0 %639
        %641 = vadd.xlane.f32.xlu0 %v610
        %v642 = vpop.xlane.xlu0 %641
        %643 = vadd.xlane.f32.xlu0 %v612
        %v644 = vpop.xlane.xlu0 %643
        %645 = vadd.xlane.f32.xlu0 %v614
        %v646 = vpop.xlane.xlu0 %645
        %647 = vadd.xlane.f32.xlu0 %v616
        %v648 = vpop.xlane.xlu0 %647
        %v649 = vlog2.pop %v618
        %v650 = vmul.f32 %v649, 0.6931472
        %v651 = vlog2.pop %v620
        %v652 = vmul.f32 %v651, 0.6931472
        %v653 = vlog2.pop %v622
        %v654 = vmul.f32 %v653, 0.6931472
        %v655 = vlog2.pop %v624
        %v656 = vmul.f32 %v655, 0.6931472
        %v657 = vlog2.pop %v626
        %v658 = vmul.f32 %v657, 0.6931472
        %v659 = vlog2.pop %v628
        %v660 = vmul.f32 %v659, 0.6931472
        %v661 = vlog2.pop %v630
        %v662 = vmul.f32 %v661, 0.6931472
        %v663 = vlog2.pop %v632
        %v664 = vmul.f32 %v663, 0.6931472
        %v665 = vlog2.pop %v634
        %v666 = vmul.f32 %v665, 0.6931472
        %v667 = vlog2.pop %v636
        %v668 = vmul.f32 %v667, 0.6931472
        %v669 = vlog2.pop %v638
        %v670 = vmul.f32 %v669, 0.6931472
        %v671 = vlog2.pop %v640
        %v672 = vmul.f32 %v671, 0.6931472
        %v673 = vlog2.pop %v642
        %v674 = vmul.f32 %v673, 0.6931472
        %v675 = vlog2.pop %v644
        %v676 = vmul.f32 %v675, 0.6931472
        %v677 = vlog2.pop %v646
        %v678 = vmul.f32 %v677, 0.6931472
        %v679 = vlog2.pop %v648
        %v680 = vmul.f32 %v679, 0.6931472
        %v681 = vsub.f32 %v569, %v650
        %v682 = vsub.f32 %v570, %v652
        %v683 = vsub.f32 %v571, %v654
        %v684 = vsub.f32 %v572, %v656
        %v685 = vsub.f32 %v573, %v658
        %v686 = vsub.f32 %v574, %v660
        %v687 = vsub.f32 %v575, %v662
        %v688 = vsub.f32 %v576, %v664
        %v689 = vsub.f32 %v577, %v666
        %v690 = vsub.f32 %v578, %v668
        %v691 = vsub.f32 %v579, %v670
        %v692 = vsub.f32 %v580, %v672
        %v693 = vsub.f32 %v581, %v674
        %v694 = vsub.f32 %v582, %v676
        %v695 = vsub.f32 %v583, %v678
        %v696 = vsub.f32 %v584, %v680
        %697 = vst [vmem:[%s208] sm:$0xff] %v681
        %698 = vst [vmem:[%s208 + $0x8] sm:$0xff] %v682
        %699 = vst [vmem:[%s208 + $0x10] sm:$0xff] %v683
        %700 = vst [vmem:[%s208 + $0x18] sm:$0xff] %v684
        %701 = vst [vmem:[%s208 + $0x20] sm:$0xff] %v685
        %702 = vst [vmem:[%s208 + $0x28] sm:$0xff] %v686
        %703 = vst [vmem:[%s208 + $0x30] sm:$0xff] %v687
        %704 = vst [vmem:[%s208 + $0x38] sm:$0xff] %v688
        %705 = vst [vmem:[%s208 + $0x40] sm:$0xff] %v689
        %706 = vst [vmem:[%s208 + $0x48] sm:$0xff] %v690
        %707 = vst [vmem:[%s208 + $0x50] sm:$0xff] %v691
        %708 = vst [vmem:[%s208 + $0x58] sm:$0xff] %v692
        %709 = vst [vmem:[%s208 + $0x60] sm:$0xff] %v693
        %710 = vst [vmem:[%s208 + $0x68] sm:$0xff] %v694
        %711 = vst [vmem:[%s208 + $0x70] sm:$0xff] %v695
        %712 = vst [vmem:[%s208 + $0x78] sm:$0xff] %v696
        %s713 = sand.u32 %s97, 1
        %s714 = scalar_lea.sflag [#allocation4], %s713
        %s715 = sand.u32 %s97, 1
        %s716 = smul.addr %s715, 128
        %s717 = scalar_lea.vmem [#allocation7], %s716
        // Predicated region
        $region41: #{tpu_custom_call.1} parent=31 // pred_check
          %p718 = pneg %p107
        $region42: #{tpu_custom_call.1} parent=31 // pred_check_branch
          %720 = sbr.rel (%p718) target = $region44
        $region43: #{tpu_custom_call.1} parent=31 // pred_region
          %s721 = smul.u32 16, %s21
          %723 = vsyncadd %s714, 0
          %s724 = smul.addr %s721, 8
          %s725 = scalar_lea.hbm %s3, %s724
          %s726 = sshll.u32 %s717, 4
          %s727 = int_to_ptr.vmem [resolvable:$true] %s726
          %s728 = sshll.u32 %s725, 4
          %s729 = int_to_ptr.hbm [resolvable:$true] %s728
          %734 = dma.vmem_to_hbm [thread:$0]  %s727, 2048, %s729, %s714, 128, 128, 8
        $region44: #{tpu_custom_call.1} parent=31 // pred_fallthru
          _
      $region32: #{tpu_custom_call.1} parent=5 // pred_fallthru
        _
      %p735 = scmp.le.s32.totalorder 2, %s16
      // Predicated region
      $region45: #{tpu_custom_call.1} parent=5 // pred_check
        %p736 = pneg %p735
      $region46: #{tpu_custom_call.1} parent=5 // pred_check_branch
        %738 = sbr.rel (%p736) target = $region48
      $region47: #{tpu_custom_call.1} parent=5 // pred_region
        %s739 = ssub.s32 %s16, 2
        // Predicated region
        $region49: #{tpu_custom_call.1} parent=47 // pred_check
          %p740 = pneg %p113
        $region50: #{tpu_custom_call.1} parent=47 // pred_check_branch
          %742 = sbr.rel (%p740) target = $region52
        $region51: #{tpu_custom_call.1} parent=47 // pred_region
          %s743 = sand.u32 %s98, 1
          %s744 = scalar_lea.sflag [#allocation4], %s743
          %s745 = sand.u32 %s98, 1
          %s746 = smul.addr %s745, 128
          %s747 = scalar_lea.vmem [#allocation7], %s746
          %749 = dma.done %s744, 2048
        $region52: #{tpu_custom_call.1} parent=47 // pred_fallthru
          _
      $region48: #{tpu_custom_call.1} parent=5 // pred_fallthru
        _
    $region6: #{tpu_custom_call.1} parent=1 // loop_footer
      %s20 = sadd.s32 1, %s16
    $region7: #{tpu_custom_call.1} parent=1 // loop_footer_branch
      %15 = sbr.rel target = $region3
    $region8: #{tpu_custom_call.1} parent=1 // loop_exit
      _
    %750 = vsyncpa [#allocation3], 1
    %s751 = scalar_lea.sflag [#allocation3], 1
    %752 = vsyncpa %s751, 1
    %753 = vsyncpa [#allocation6], 1
    %754 = vsyncpa [#allocation4], 1
    %s755 = scalar_lea.sflag [#allocation4], 1
    %756 = vsyncpa %s755, 1

</llo_original>
